<compile_context>
chip_gen: v7x
topology: tpu7x:2x2x1
jax: 0.10.0
libtpu: 0.0.40
codegen_flags: <defaults>
</compile_context>

<pallas_src>
import functools

import jax
import jax.numpy as jnp
from jax.experimental import pallas as pl
from jax.experimental.pallas import tpu as pltpu

ACT_BITS = 6      # act_precision
WEIGHT_BITS = 6   # weight_precision

_N_ACT = float(2 ** (ACT_BITS - 1) - 1)    # 31
_LANE = 128


# ----------------------------- kernel helpers ------------------------------
def _safe_recip(x):
    """1/x via the EUP approximate reciprocal (free slot vs the VALU) plus one
    Newton step (~f32 accuracy)."""
    r = pl.reciprocal(x, approx=True)
    return r * (2.0 - x * r)


def _quant_act_int(h):
    """HAWQ QuantAct semantics (symmetric per-tensor, current-batch abs-max).
    Returns the INTEGER-valued tensor and its scale (no dequant/requant
    round-trip between layers)."""
    absmax = jnp.max(jnp.max(jnp.abs(h), axis=1, keepdims=True),
                     axis=0, keepdims=True)                  # (1, 1)
    safe = jnp.maximum(absmax, 1e-8)
    inv = _N_ACT * _safe_recip(safe)                         # 31 / absmax
    q = jnp.clip(jnp.round(h * inv), -_N_ACT, _N_ACT)        # integer-valued f32
    return q, safe * (1.0 / _N_ACT)


def _quant_act_relu_int(h):
    """QuantAct followed by ReLU with clip+ReLU fused:
    max(clip(round(h/s), -31, 31), 0) == min(max(round(h/s), 0), 31)."""
    absmax = jnp.max(jnp.max(jnp.abs(h), axis=1, keepdims=True),
                     axis=0, keepdims=True)                  # pre-ReLU abs-max
    safe = jnp.maximum(absmax, 1e-8)
    inv = _N_ACT * _safe_recip(safe)
    q = jnp.minimum(jnp.maximum(jnp.round(h * inv), 0.0), _N_ACT)
    return q, safe * (1.0 / _N_ACT)


def _dense_int(q, act_sf, w_ref, b_ref, w_scale):
    """BN-folded quantized linear (HAWQ QuantBnLinear, per-tensor) on integer
    activations in batch-on-lanes layout: W[out,in] @ Q[in,tb] on the MXU with
    bf16 operands (|v| <= 31 exact, f32 accumulate => exact integer matmul)."""
    bias_scale = w_scale * act_sf                            # (1, 1)
    b_int = jnp.round(b_ref[...] * _safe_recip(bias_scale))  # (out, 1)
    # TODO(synk): HAWQ keeps the bias as a 32-bit integer; the module's
    # bias_precision=6 clip is intentionally dropped (clipping folded-BN
    # biases to +/-31 would dominate the accuracy gap).
    acc = jnp.dot(w_ref[...], q.astype(jnp.bfloat16),
                  preferred_element_type=jnp.float32)        # (out, tb)
    return (acc + b_int) * bias_scale


def qmodel_kernel(ws_ref,                       # (4,) weight scales in SMEM
                  x_ref,                        # (f_in, tb)
                  w1_ref, b1_ref,
                  w2_ref, b2_ref,
                  w3_ref, b3_ref,
                  w4_ref, b4_ref,
                  out_ref):                     # (n_out, tb)
    # quant_input
    q, sf = _quant_act_int(x_ref[...])

    # dense_k (BN folded) -> quant_act_k -> ReLU (clip+ReLU fused)
    h = _dense_int(q, sf, w1_ref, b1_ref, ws_ref[0])
    q, sf = _quant_act_relu_int(h)
    h = _dense_int(q, sf, w2_ref, b2_ref, ws_ref[1])
    q, sf = _quant_act_relu_int(h)
    h = _dense_int(q, sf, w3_ref, b3_ref, ws_ref[2])
    q, sf = _quant_act_relu_int(h)

    # dense_4 -> quant_output -> softmax over the class axis (axis 0 here,
    # equivalent to dim=1 of the [batch, classes] reference layout)
    h = _dense_int(q, sf, w4_ref, b4_ref, ws_ref[3])
    q, sf = _quant_act_int(h)
    logits = q * sf                                          # (n_out, tb)
    m = jnp.max(logits, axis=0, keepdims=True)
    e = jnp.exp(logits - m)
    denom = jnp.sum(e, axis=0, keepdims=True)                # (1, tb)
    out_ref[...] = e * _safe_recip(denom)


# ------------------------------ JAX-side glue -------------------------------
def fold_bn_and_quantize(w, b, gamma, beta, mean, var, eps=1e-5):
    """Fold BN into the linear layer and quantize the folded weight (per-tensor
    symmetric, WEIGHT_BITS).  Returns (W_q [out,in] bf16, b_fold [out,1] f32,
    w_scale scalar f32)."""
    factor = gamma / jnp.sqrt(var + eps)             # (out,)
    w_fold = w * factor[:, None]                     # (out, in)
    b_fold = beta + (b - mean) * factor              # (out,)
    n_w = float(2 ** (WEIGHT_BITS - 1) - 1)
    w_scale = jnp.maximum(jnp.max(jnp.abs(w_fold)) / n_w, 1e-8)
    w_q = jnp.clip(jnp.round(w_fold / w_scale), -n_w, n_w)
    # bf16 storage: |q| <= 31 integers are exact in bf16; MXU accumulates in
    # f32, so the integer matmul is exact on v5e/v6e/v7x (no int MXU on v7x).
    return (w_q.astype(jnp.bfloat16),
            b_fold.reshape(-1, 1).astype(jnp.float32),
            w_scale.astype(jnp.float32))


def _build_specs(tile_b, f_in, dims):
    """dims: list of (out, in) per layer.  Weights/biases get constant
    index_maps so they stay resident in VMEM across batch tiles."""
    n_out = dims[-1][0]
    const = lambda i, ws: (0, 0)
    in_specs = [pl.BlockSpec((f_in, tile_b), lambda i, ws: (0, i))]   # x^T tile
    for (fout, fin) in dims:
        in_specs.append(pl.BlockSpec((fout, fin), const))   # W  [out, in]
        in_specs.append(pl.BlockSpec((fout, 1), const))     # b  [out, 1]
    out_spec = pl.BlockSpec((n_out, tile_b), lambda i, ws: (0, i))
    return in_specs, out_spec


@functools.partial(jax.jit, static_argnames=("tile_b",))
def qthreelayer_bnfold_forward(x, params, tile_b=2048):
    B, f_in = x.shape
    dims = [(w_q.shape[0], w_q.shape[1]) for (w_q, _, _) in params]
    n_out = dims[-1][0]

    # Batch lives on the lane dim -> tile must be a multiple of 128.  For
    # B >= 256 split into >= 2 tiles (both TensorCores busy on v7x); large
    # default tile (2048, multiple of 256 for v6e) amortizes per-step overhead.
    if B >= 2 * _LANE:
        TB = min(tile_b, ((B + 2 * _LANE - 1) // (2 * _LANE)) * _LANE)
    else:
        TB = _LANE
    num_tiles = -(-B // TB)
    Bp = num_tiles * TB

    # Transpose once so batch is the last (lane) dim.  Padding (at most one
    # tile) replicates the last real row so padded columns never perturb the
    # per-tile activation abs-max and yield finite (discarded) outputs.
    x_t = x.T
    if Bp != B:
        x_t = jnp.pad(x_t, ((0, 0), (0, Bp - B)), mode="edge")

    # TODO(synk): when B > TB the dynamic QuantAct abs-max is per-tile rather
    # than per-batch (HAWQ training mode uses batch stats / running EMA).
    w_scales = jnp.stack([s for (_, _, s) in params]).astype(jnp.float32)  # (4,)
    flat = []
    for (w_q, b_fold, _) in params:
        flat += [w_q, b_fold]

    in_specs, out_spec = _build_specs(TB, f_in, dims)

    out = pl.pallas_call(
        qmodel_kernel,
        out_shape=jax.ShapeDtypeStruct((n_out, Bp), jnp.float32),
        grid_spec=pltpu.PrefetchScalarGridSpec(
            num_scalar_prefetch=1,             # w_scales -> SMEM
            grid=(Bp // TB,),
            in_specs=in_specs,
            out_specs=out_spec,
        ),
        compiler_params=pltpu.CompilerParams(
            dimension_semantics=("parallel",)),  # batch tiles shard across TCs
    )(w_scales, x_t, *flat)
    return out[:, :B].T


# ---------------------------------- main -------------------------------------
if __name__ == "__main__":
    # Jet-tagging three-layer model: 16 -> 64 -> 32 -> 32 -> 5
    B, F_IN = 32, 16
    layer_dims = [(16, 64), (64, 32), (32, 32), (32, 5)]

    key = jax.random.PRNGKey(0)
    keys = jax.random.split(key, 1 + 6 * len(layer_dims))
    x = jax.random.normal(keys[0], (B, F_IN), dtype=jnp.float32)

    params = []
    ki = 1
    for (fin, fout) in layer_dims:
        w = jax.random.normal(keys[ki], (fout, fin), jnp.float32) / jnp.sqrt(float(fin)); ki += 1
        b = 0.1 * jax.random.normal(keys[ki], (fout,), jnp.float32); ki += 1
        gamma = 1.0 + 0.1 * jax.random.normal(keys[ki], (fout,), jnp.float32); ki += 1
        beta = 0.1 * jax.random.normal(keys[ki], (fout,), jnp.float32); ki += 1
        mean = 0.1 * jax.random.normal(keys[ki], (fout,), jnp.float32); ki += 1
        var = jnp.abs(1.0 + 0.1 * jax.random.normal(keys[ki], (fout,), jnp.float32)); ki += 1
        params.append(fold_bn_and_quantize(w, b, gamma, beta, mean, var))

    out = jax.block_until_ready(qthreelayer_bnfold_forward(x, params))

    assert out.shape == (B, 5), out.shape
    assert bool(jnp.all(jnp.isfinite(out)))
    assert bool(jnp.allclose(jnp.sum(out, axis=1), 1.0, atol=1e-3))
    # TODO(synk): HAWQ's running min/max EMA, fixed-point requantization and
    # per-channel weight scales are approximated with per-tensor dynamic
    # symmetric quantization; BN is folded with running stats (eval-mode fold).
    print("KERNEL_OK")
</pallas_src>

<mosaic_0001>
module attributes {stable_mosaic.version = 11 : i64} {
  func.func @qmodel_kernel(%arg0: i32, %arg1: memref<4xf32, #tpu.memory_space<smem>>, %arg2: memref<16x128xf32, #tpu.memory_space<vmem>>, %arg3: memref<64x16xbf16, #tpu.memory_space<vmem>>, %arg4: memref<64x1xf32, #tpu.memory_space<vmem>>, %arg5: memref<32x64xbf16, #tpu.memory_space<vmem>>, %arg6: memref<32x1xf32, #tpu.memory_space<vmem>>, %arg7: memref<32x32xbf16, #tpu.memory_space<vmem>>, %arg8: memref<32x1xf32, #tpu.memory_space<vmem>>, %arg9: memref<5x32xbf16, #tpu.memory_space<vmem>>, %arg10: memref<5x1xf32, #tpu.memory_space<vmem>>, %arg11: memref<5x128xf32, #tpu.memory_space<vmem>>) attributes {dimension_semantics = [#tpu.dimension_semantics<parallel>], iteration_bounds = array<i64: 1>, scalar_prefetch = 1 : i64, scratch_operands = 0 : i64, tpu.core_type = #tpu.core_type<tc>, window_params = [{transform_indices = @transform_0, window_bounds = array<i64: 16, 128>}, {pipeline_mode = #tpu.pipeline_mode<synchronous>, transform_indices = @transform_1, window_bounds = array<i64: 64, 16>}, {pipeline_mode = #tpu.pipeline_mode<synchronous>, transform_indices = @transform_2, window_bounds = array<i64: 64, 1>}, {pipeline_mode = #tpu.pipeline_mode<synchronous>, transform_indices = @transform_3, window_bounds = array<i64: 32, 64>}, {pipeline_mode = #tpu.pipeline_mode<synchronous>, transform_indices = @transform_4, window_bounds = array<i64: 32, 1>}, {pipeline_mode = #tpu.pipeline_mode<synchronous>, transform_indices = @transform_5, window_bounds = array<i64: 32, 32>}, {pipeline_mode = #tpu.pipeline_mode<synchronous>, transform_indices = @transform_6, window_bounds = array<i64: 32, 1>}, {pipeline_mode = #tpu.pipeline_mode<synchronous>, transform_indices = @transform_7, window_bounds = array<i64: 5, 32>}, {pipeline_mode = #tpu.pipeline_mode<synchronous>, transform_indices = @transform_8, window_bounds = array<i64: 5, 1>}, {transform_indices = @transform_9, window_bounds = array<i64: 5, 128>}]} {
    %c0 = arith.constant 0 : index
    %c0_0 = arith.constant 0 : index
    %0 = vector.load %arg2[%c0, %c0_0] : memref<16x128xf32, #tpu.memory_space<vmem>>, vector<16x128xf32>
    %1 = math.absf %0 : vector<16x128xf32>
    %cst = arith.constant dense<0xFF800000> : vector<16xf32>
    %2 = vector.multi_reduction <maximumf>, %1, %cst [1] : vector<16x128xf32> to vector<16xf32>
    %3 = vector.shape_cast %2 : vector<16xf32> to vector<16x1xf32>
    %cst_1 = arith.constant dense<0xFF800000> : vector<1xf32>
    %4 = vector.multi_reduction <maximumf>, %3, %cst_1 [0] : vector<16x1xf32> to vector<1xf32>
    %5 = vector.shape_cast %4 : vector<1xf32> to vector<1x1xf32>
    %cst_2 = arith.constant 9.99999993E-9 : f32
    %6 = vector.broadcast %cst_2 : f32 to vector<1x1xf32>
    %7 = arith.maximumf %5, %6 : vector<1x1xf32>
    %8 = tpu.reciprocal %7 {approx = true} : vector<1x1xf32> -> vector<1x1xf32>
    %9 = arith.mulf %7, %8 : vector<1x1xf32>
    %cst_3 = arith.constant 2.000000e+00 : f32
    %10 = vector.broadcast %cst_3 : f32 to vector<1x1xf32>
    %11 = arith.subf %10, %9 : vector<1x1xf32>
    %12 = arith.mulf %8, %11 : vector<1x1xf32>
    %cst_4 = arith.constant 3.100000e+01 : f32
    %13 = vector.broadcast %cst_4 : f32 to vector<1x1xf32>
    %14 = arith.mulf %13, %12 : vector<1x1xf32>
    %15 = vector.broadcast %14 : vector<1x1xf32> to vector<16x128xf32>
    %16 = arith.mulf %0, %15 : vector<16x128xf32>
    %17 = math.roundeven %16 : vector<16x128xf32>
    %cst_5 = arith.constant -3.100000e+01 : f32
    %cst_6 = arith.constant 3.100000e+01 : f32
    %18 = vector.broadcast %cst_5 : f32 to vector<16x128xf32>
    %19 = arith.maximumf %18, %17 : vector<16x128xf32>
    %20 = vector.broadcast %cst_6 : f32 to vector<16x128xf32>
    %21 = arith.minimumf %20, %19 : vector<16x128xf32>
    %cst_7 = arith.constant 0.0322580636 : f32
    %22 = vector.broadcast %cst_7 : f32 to vector<1x1xf32>
    %23 = arith.mulf %7, %22 : vector<1x1xf32>
    %c0_8 = arith.constant 0 : index
    %24 = memref.load %arg1[%c0_8] : memref<4xf32, #tpu.memory_space<smem>>
    %25 = vector.broadcast %24 : f32 to vector<1x1xf32>
    %26 = arith.mulf %25, %23 : vector<1x1xf32>
    %c0_9 = arith.constant 0 : index
    %c0_10 = arith.constant 0 : index
    %27 = vector.load %arg4[%c0_9, %c0_10] : memref<64x1xf32, #tpu.memory_space<vmem>>, vector<64x1xf32>
    %28 = tpu.reciprocal %26 {approx = true} : vector<1x1xf32> -> vector<1x1xf32>
    %29 = arith.mulf %26, %28 : vector<1x1xf32>
    %cst_11 = arith.constant 2.000000e+00 : f32
    %30 = vector.broadcast %cst_11 : f32 to vector<1x1xf32>
    %31 = arith.subf %30, %29 : vector<1x1xf32>
    %32 = arith.mulf %28, %31 : vector<1x1xf32>
    %33 = vector.broadcast %32 : vector<1x1xf32> to vector<64x1xf32>
    %34 = arith.mulf %27, %33 : vector<64x1xf32>
    %35 = math.roundeven %34 : vector<64x1xf32>
    %c0_12 = arith.constant 0 : index
    %c0_13 = arith.constant 0 : index
    %36 = vector.load %arg3[%c0_12, %c0_13] : memref<64x16xbf16, #tpu.memory_space<vmem>>, vector<64x16xbf16>
    %37 = arith.truncf %21 : vector<16x128xf32> to vector<16x128xbf16>
    %cst_14 = arith.constant dense<0.000000e+00> : vector<64x128xf32>
    %38 = tpu.matmul %36, %37, %cst_14 {dimension_numbers = #tpu.dot_dimension_numbers<[1], [0], [0], [1], [0, 0, 1, 1], [], []>} : vector<64x16xbf16>, vector<16x128xbf16>, vector<64x128xf32> -> vector<64x128xf32>
    %39 = vector.broadcast %35 : vector<64x1xf32> to vector<64x128xf32>
    %40 = arith.addf %38, %39 : vector<64x128xf32>
    %41 = vector.broadcast %26 : vector<1x1xf32> to vector<64x128xf32>
    %42 = arith.mulf %40, %41 : vector<64x128xf32>
    %43 = math.absf %42 : vector<64x128xf32>
    %cst_15 = arith.constant dense<0xFF800000> : vector<64xf32>
    %44 = vector.multi_reduction <maximumf>, %43, %cst_15 [1] : vector<64x128xf32> to vector<64xf32>
    %45 = vector.shape_cast %44 : vector<64xf32> to vector<64x1xf32>
    %cst_16 = arith.constant dense<0xFF800000> : vector<1xf32>
    %46 = vector.multi_reduction <maximumf>, %45, %cst_16 [0] : vector<64x1xf32> to vector<1xf32>
    %47 = vector.shape_cast %46 : vector<1xf32> to vector<1x1xf32>
    %cst_17 = arith.constant 9.99999993E-9 : f32
    %48 = vector.broadcast %cst_17 : f32 to vector<1x1xf32>
    %49 = arith.maximumf %47, %48 : vector<1x1xf32>
    %50 = tpu.reciprocal %49 {approx = true} : vector<1x1xf32> -> vector<1x1xf32>
    %51 = arith.mulf %49, %50 : vector<1x1xf32>
    %cst_18 = arith.constant 2.000000e+00 : f32
    %52 = vector.broadcast %cst_18 : f32 to vector<1x1xf32>
    %53 = arith.subf %52, %51 : vector<1x1xf32>
    %54 = arith.mulf %50, %53 : vector<1x1xf32>
    %cst_19 = arith.constant 3.100000e+01 : f32
    %55 = vector.broadcast %cst_19 : f32 to vector<1x1xf32>
    %56 = arith.mulf %55, %54 : vector<1x1xf32>
    %57 = vector.broadcast %56 : vector<1x1xf32> to vector<64x128xf32>
    %58 = arith.mulf %42, %57 : vector<64x128xf32>
    %59 = math.roundeven %58 : vector<64x128xf32>
    %cst_20 = arith.constant 0.000000e+00 : f32
    %60 = vector.broadcast %cst_20 : f32 to vector<64x128xf32>
    %61 = arith.maximumf %59, %60 : vector<64x128xf32>
    %cst_21 = arith.constant 3.100000e+01 : f32
    %62 = vector.broadcast %cst_21 : f32 to vector<64x128xf32>
    %63 = arith.minimumf %61, %62 : vector<64x128xf32>
    %cst_22 = arith.constant 0.0322580636 : f32
    %64 = vector.broadcast %cst_22 : f32 to vector<1x1xf32>
    %65 = arith.mulf %49, %64 : vector<1x1xf32>
    %c1 = arith.constant 1 : index
    %66 = memref.load %arg1[%c1] : memref<4xf32, #tpu.memory_space<smem>>
    %67 = vector.broadcast %66 : f32 to vector<1x1xf32>
    %68 = arith.mulf %67, %65 : vector<1x1xf32>
    %c0_23 = arith.constant 0 : index
    %c0_24 = arith.constant 0 : index
    %69 = vector.load %arg6[%c0_23, %c0_24] : memref<32x1xf32, #tpu.memory_space<vmem>>, vector<32x1xf32>
    %70 = tpu.reciprocal %68 {approx = true} : vector<1x1xf32> -> vector<1x1xf32>
    %71 = arith.mulf %68, %70 : vector<1x1xf32>
    %cst_25 = arith.constant 2.000000e+00 : f32
    %72 = vector.broadcast %cst_25 : f32 to vector<1x1xf32>
    %73 = arith.subf %72, %71 : vector<1x1xf32>
    %74 = arith.mulf %70, %73 : vector<1x1xf32>
    %75 = vector.broadcast %74 : vector<1x1xf32> to vector<32x1xf32>
    %76 = arith.mulf %69, %75 : vector<32x1xf32>
    %77 = math.roundeven %76 : vector<32x1xf32>
    %c0_26 = arith.constant 0 : index
    %c0_27 = arith.constant 0 : index
    %78 = vector.load %arg5[%c0_26, %c0_27] : memref<32x64xbf16, #tpu.memory_space<vmem>>, vector<32x64xbf16>
    %79 = arith.truncf %63 : vector<64x128xf32> to vector<64x128xbf16>
    %cst_28 = arith.constant dense<0.000000e+00> : vector<32x128xf32>
    %80 = tpu.matmul %78, %79, %cst_28 {dimension_numbers = #tpu.dot_dimension_numbers<[1], [0], [0], [1], [0, 0, 1, 1], [], []>} : vector<32x64xbf16>, vector<64x128xbf16>, vector<32x128xf32> -> vector<32x128xf32>
    %81 = vector.broadcast %77 : vector<32x1xf32> to vector<32x128xf32>
    %82 = arith.addf %80, %81 : vector<32x128xf32>
    %83 = vector.broadcast %68 : vector<1x1xf32> to vector<32x128xf32>
    %84 = arith.mulf %82, %83 : vector<32x128xf32>
    %85 = math.absf %84 : vector<32x128xf32>
    %cst_29 = arith.constant dense<0xFF800000> : vector<32xf32>
    %86 = vector.multi_reduction <maximumf>, %85, %cst_29 [1] : vector<32x128xf32> to vector<32xf32>
    %87 = vector.shape_cast %86 : vector<32xf32> to vector<32x1xf32>
    %cst_30 = arith.constant dense<0xFF800000> : vector<1xf32>
    %88 = vector.multi_reduction <maximumf>, %87, %cst_30 [0] : vector<32x1xf32> to vector<1xf32>
    %89 = vector.shape_cast %88 : vector<1xf32> to vector<1x1xf32>
    %cst_31 = arith.constant 9.99999993E-9 : f32
    %90 = vector.broadcast %cst_31 : f32 to vector<1x1xf32>
    %91 = arith.maximumf %89, %90 : vector<1x1xf32>
    %92 = tpu.reciprocal %91 {approx = true} : vector<1x1xf32> -> vector<1x1xf32>
    %93 = arith.mulf %91, %92 : vector<1x1xf32>
    %cst_32 = arith.constant 2.000000e+00 : f32
    %94 = vector.broadcast %cst_32 : f32 to vector<1x1xf32>
    %95 = arith.subf %94, %93 : vector<1x1xf32>
    %96 = arith.mulf %92, %95 : vector<1x1xf32>
    %cst_33 = arith.constant 3.100000e+01 : f32
    %97 = vector.broadcast %cst_33 : f32 to vector<1x1xf32>
    %98 = arith.mulf %97, %96 : vector<1x1xf32>
    %99 = vector.broadcast %98 : vector<1x1xf32> to vector<32x128xf32>
    %100 = arith.mulf %84, %99 : vector<32x128xf32>
    %101 = math.roundeven %100 : vector<32x128xf32>
    %cst_34 = arith.constant 0.000000e+00 : f32
    %102 = vector.broadcast %cst_34 : f32 to vector<32x128xf32>
    %103 = arith.maximumf %101, %102 : vector<32x128xf32>
    %cst_35 = arith.constant 3.100000e+01 : f32
    %104 = vector.broadcast %cst_35 : f32 to vector<32x128xf32>
    %105 = arith.minimumf %103, %104 : vector<32x128xf32>
    %cst_36 = arith.constant 0.0322580636 : f32
    %106 = vector.broadcast %cst_36 : f32 to vector<1x1xf32>
    %107 = arith.mulf %91, %106 : vector<1x1xf32>
    %c2 = arith.constant 2 : index
    %108 = memref.load %arg1[%c2] : memref<4xf32, #tpu.memory_space<smem>>
    %109 = vector.broadcast %108 : f32 to vector<1x1xf32>
    %110 = arith.mulf %109, %107 : vector<1x1xf32>
    %c0_37 = arith.constant 0 : index
    %c0_38 = arith.constant 0 : index
    %111 = vector.load %arg8[%c0_37, %c0_38] : memref<32x1xf32, #tpu.memory_space<vmem>>, vector<32x1xf32>
    %112 = tpu.reciprocal %110 {approx = true} : vector<1x1xf32> -> vector<1x1xf32>
    %113 = arith.mulf %110, %112 : vector<1x1xf32>
    %cst_39 = arith.constant 2.000000e+00 : f32
    %114 = vector.broadcast %cst_39 : f32 to vector<1x1xf32>
    %115 = arith.subf %114, %113 : vector<1x1xf32>
    %116 = arith.mulf %112, %115 : vector<1x1xf32>
    %117 = vector.broadcast %116 : vector<1x1xf32> to vector<32x1xf32>
    %118 = arith.mulf %111, %117 : vector<32x1xf32>
    %119 = math.roundeven %118 : vector<32x1xf32>
    %c0_40 = arith.constant 0 : index
    %c0_41 = arith.constant 0 : index
    %120 = vector.load %arg7[%c0_40, %c0_41] : memref<32x32xbf16, #tpu.memory_space<vmem>>, vector<32x32xbf16>
    %121 = arith.truncf %105 : vector<32x128xf32> to vector<32x128xbf16>
    %cst_42 = arith.constant dense<0.000000e+00> : vector<32x128xf32>
    %122 = tpu.matmul %120, %121, %cst_42 {dimension_numbers = #tpu.dot_dimension_numbers<[1], [0], [0], [1], [0, 0, 1, 1], [], []>} : vector<32x32xbf16>, vector<32x128xbf16>, vector<32x128xf32> -> vector<32x128xf32>
    %123 = vector.broadcast %119 : vector<32x1xf32> to vector<32x128xf32>
    %124 = arith.addf %122, %123 : vector<32x128xf32>
    %125 = vector.broadcast %110 : vector<1x1xf32> to vector<32x128xf32>
    %126 = arith.mulf %124, %125 : vector<32x128xf32>
    %127 = math.absf %126 : vector<32x128xf32>
    %cst_43 = arith.constant dense<0xFF800000> : vector<32xf32>
    %128 = vector.multi_reduction <maximumf>, %127, %cst_43 [1] : vector<32x128xf32> to vector<32xf32>
    %129 = vector.shape_cast %128 : vector<32xf32> to vector<32x1xf32>
    %cst_44 = arith.constant dense<0xFF800000> : vector<1xf32>
    %130 = vector.multi_reduction <maximumf>, %129, %cst_44 [0] : vector<32x1xf32> to vector<1xf32>
    %131 = vector.shape_cast %130 : vector<1xf32> to vector<1x1xf32>
    %cst_45 = arith.constant 9.99999993E-9 : f32
    %132 = vector.broadcast %cst_45 : f32 to vector<1x1xf32>
    %133 = arith.maximumf %131, %132 : vector<1x1xf32>
    %134 = tpu.reciprocal %133 {approx = true} : vector<1x1xf32> -> vector<1x1xf32>
    %135 = arith.mulf %133, %134 : vector<1x1xf32>
    %cst_46 = arith.constant 2.000000e+00 : f32
    %136 = vector.broadcast %cst_46 : f32 to vector<1x1xf32>
    %137 = arith.subf %136, %135 : vector<1x1xf32>
    %138 = arith.mulf %134, %137 : vector<1x1xf32>
    %cst_47 = arith.constant 3.100000e+01 : f32
    %139 = vector.broadcast %cst_47 : f32 to vector<1x1xf32>
    %140 = arith.mulf %139, %138 : vector<1x1xf32>
    %141 = vector.broadcast %140 : vector<1x1xf32> to vector<32x128xf32>
    %142 = arith.mulf %126, %141 : vector<32x128xf32>
    %143 = math.roundeven %142 : vector<32x128xf32>
    %cst_48 = arith.constant 0.000000e+00 : f32
    %144 = vector.broadcast %cst_48 : f32 to vector<32x128xf32>
    %145 = arith.maximumf %143, %144 : vector<32x128xf32>
    %cst_49 = arith.constant 3.100000e+01 : f32
    %146 = vector.broadcast %cst_49 : f32 to vector<32x128xf32>
    %147 = arith.minimumf %145, %146 : vector<32x128xf32>
    %cst_50 = arith.constant 0.0322580636 : f32
    %148 = vector.broadcast %cst_50 : f32 to vector<1x1xf32>
    %149 = arith.mulf %133, %148 : vector<1x1xf32>
    %c3 = arith.constant 3 : index
    %150 = memref.load %arg1[%c3] : memref<4xf32, #tpu.memory_space<smem>>
    %151 = vector.broadcast %150 : f32 to vector<1x1xf32>
    %152 = arith.mulf %151, %149 : vector<1x1xf32>
    %c0_51 = arith.constant 0 : index
    %c0_52 = arith.constant 0 : index
    %153 = vector.load %arg10[%c0_51, %c0_52] : memref<5x1xf32, #tpu.memory_space<vmem>>, vector<5x1xf32>
    %154 = tpu.reciprocal %152 {approx = true} : vector<1x1xf32> -> vector<1x1xf32>
    %155 = arith.mulf %152, %154 : vector<1x1xf32>
    %cst_53 = arith.constant 2.000000e+00 : f32
    %156 = vector.broadcast %cst_53 : f32 to vector<1x1xf32>
    %157 = arith.subf %156, %155 : vector<1x1xf32>
    %158 = arith.mulf %154, %157 : vector<1x1xf32>
    %159 = vector.broadcast %158 : vector<1x1xf32> to vector<5x1xf32>
    %160 = arith.mulf %153, %159 : vector<5x1xf32>
    %161 = math.roundeven %160 : vector<5x1xf32>
    %c0_54 = arith.constant 0 : index
    %c0_55 = arith.constant 0 : index
    %162 = vector.load %arg9[%c0_54, %c0_55] : memref<5x32xbf16, #tpu.memory_space<vmem>>, vector<5x32xbf16>
    %163 = arith.truncf %147 : vector<32x128xf32> to vector<32x128xbf16>
    %cst_56 = arith.constant dense<0.000000e+00> : vector<5x128xf32>
    %164 = tpu.matmul %162, %163, %cst_56 {dimension_numbers = #tpu.dot_dimension_numbers<[1], [0], [0], [1], [0, 0, 1, 1], [], []>} : vector<5x32xbf16>, vector<32x128xbf16>, vector<5x128xf32> -> vector<5x128xf32>
    %165 = vector.broadcast %161 : vector<5x1xf32> to vector<5x128xf32>
    %166 = arith.addf %164, %165 : vector<5x128xf32>
    %167 = vector.broadcast %152 : vector<1x1xf32> to vector<5x128xf32>
    %168 = arith.mulf %166, %167 : vector<5x128xf32>
    %169 = math.absf %168 : vector<5x128xf32>
    %cst_57 = arith.constant dense<0xFF800000> : vector<5xf32>
    %170 = vector.multi_reduction <maximumf>, %169, %cst_57 [1] : vector<5x128xf32> to vector<5xf32>
    %171 = vector.shape_cast %170 : vector<5xf32> to vector<5x1xf32>
    %cst_58 = arith.constant dense<0xFF800000> : vector<1xf32>
    %172 = vector.multi_reduction <maximumf>, %171, %cst_58 [0] : vector<5x1xf32> to vector<1xf32>
    %173 = vector.shape_cast %172 : vector<1xf32> to vector<1x1xf32>
    %cst_59 = arith.constant 9.99999993E-9 : f32
    %174 = vector.broadcast %cst_59 : f32 to vector<1x1xf32>
    %175 = arith.maximumf %173, %174 : vector<1x1xf32>
    %176 = tpu.reciprocal %175 {approx = true} : vector<1x1xf32> -> vector<1x1xf32>
    %177 = arith.mulf %175, %176 : vector<1x1xf32>
    %cst_60 = arith.constant 2.000000e+00 : f32
    %178 = vector.broadcast %cst_60 : f32 to vector<1x1xf32>
    %179 = arith.subf %178, %177 : vector<1x1xf32>
    %180 = arith.mulf %176, %179 : vector<1x1xf32>
    %cst_61 = arith.constant 3.100000e+01 : f32
    %181 = vector.broadcast %cst_61 : f32 to vector<1x1xf32>
    %182 = arith.mulf %181, %180 : vector<1x1xf32>
    %183 = vector.broadcast %182 : vector<1x1xf32> to vector<5x128xf32>
    %184 = arith.mulf %168, %183 : vector<5x128xf32>
    %185 = math.roundeven %184 : vector<5x128xf32>
    %cst_62 = arith.constant -3.100000e+01 : f32
    %cst_63 = arith.constant 3.100000e+01 : f32
    %186 = vector.broadcast %cst_62 : f32 to vector<5x128xf32>
    %187 = arith.maximumf %186, %185 : vector<5x128xf32>
    %188 = vector.broadcast %cst_63 : f32 to vector<5x128xf32>
    %189 = arith.minimumf %188, %187 : vector<5x128xf32>
    %cst_64 = arith.constant 0.0322580636 : f32
    %190 = vector.broadcast %cst_64 : f32 to vector<1x1xf32>
    %191 = arith.mulf %175, %190 : vector<1x1xf32>
    %192 = vector.broadcast %191 : vector<1x1xf32> to vector<5x128xf32>
    %193 = arith.mulf %189, %192 : vector<5x128xf32>
    %cst_65 = arith.constant dense<0xFF800000> : vector<128xf32>
    %194 = vector.multi_reduction <maximumf>, %193, %cst_65 [0] : vector<5x128xf32> to vector<128xf32>
    %195 = vector.shape_cast %194 : vector<128xf32> to vector<1x128xf32>
    %196 = vector.broadcast %195 : vector<1x128xf32> to vector<5x128xf32>
    %197 = arith.subf %193, %196 : vector<5x128xf32>
    %198 = math.exp %197 : vector<5x128xf32>
    %cst_66 = arith.constant dense<0.000000e+00> : vector<128xf32>
    %199 = vector.multi_reduction <add>, %198, %cst_66 [0] : vector<5x128xf32> to vector<128xf32>
    %200 = vector.shape_cast %199 : vector<128xf32> to vector<1x128xf32>
    %201 = tpu.reciprocal %200 {approx = true} : vector<1x128xf32> -> vector<1x128xf32>
    %202 = arith.mulf %200, %201 : vector<1x128xf32>
    %cst_67 = arith.constant 2.000000e+00 : f32
    %203 = vector.broadcast %cst_67 : f32 to vector<1x128xf32>
    %204 = arith.subf %203, %202 : vector<1x128xf32>
    %205 = arith.mulf %201, %204 : vector<1x128xf32>
    %206 = vector.broadcast %205 : vector<1x128xf32> to vector<5x128xf32>
    %207 = arith.mulf %198, %206 : vector<5x128xf32>
    %c0_68 = arith.constant 0 : index
    %c0_69 = arith.constant 0 : index
    %208 = vector.load %arg11[%c0_68, %c0_69] : memref<5x128xf32, #tpu.memory_space<vmem>>, vector<5x128xf32>
    tpu.vector_store %arg11[%c0_68, %c0_69], %207 {strides = array<i32>} : memref<5x128xf32, #tpu.memory_space<vmem>>, vector<5x128xf32>,
    return
  }
  func.func @transform_0(%arg0: i32, %arg1: memref<4xf32, #tpu.memory_space<smem>>) -> (i32, i32) {
    %c0_i32 = arith.constant 0 : i32
    %c0_i32_0 = arith.constant 0 : i32
    return %c0_i32, %arg0 : i32, i32
  }
  func.func @transform_1(%arg0: i32, %arg1: memref<4xf32, #tpu.memory_space<smem>>) -> (i32, i32) {
    %c0_i32 = arith.constant 0 : i32
    %c0_i32_0 = arith.constant 0 : i32
    %c0_i32_1 = arith.constant 0 : i32
    return %c0_i32, %c0_i32_0 : i32, i32
  }
  func.func @transform_2(%arg0: i32, %arg1: memref<4xf32, #tpu.memory_space<smem>>) -> (i32, i32) {
    %c0_i32 = arith.constant 0 : i32
    %c0_i32_0 = arith.constant 0 : i32
    %c0_i32_1 = arith.constant 0 : i32
    return %c0_i32, %c0_i32_0 : i32, i32
  }
  func.func @transform_3(%arg0: i32, %arg1: memref<4xf32, #tpu.memory_space<smem>>) -> (i32, i32) {
    %c0_i32 = arith.constant 0 : i32
    %c0_i32_0 = arith.constant 0 : i32
    %c0_i32_1 = arith.constant 0 : i32
    return %c0_i32, %c0_i32_0 : i32, i32
  }
  func.func @transform_4(%arg0: i32, %arg1: memref<4xf32, #tpu.memory_space<smem>>) -> (i32, i32) {
    %c0_i32 = arith.constant 0 : i32
    %c0_i32_0 = arith.constant 0 : i32
    %c0_i32_1 = arith.constant 0 : i32
    return %c0_i32, %c0_i32_0 : i32, i32
  }
  func.func @transform_5(%arg0: i32, %arg1: memref<4xf32, #tpu.memory_space<smem>>) -> (i32, i32) {
    %c0_i32 = arith.constant 0 : i32
    %c0_i32_0 = arith.constant 0 : i32
    %c0_i32_1 = arith.constant 0 : i32
    return %c0_i32, %c0_i32_0 : i32, i32
  }
  func.func @transform_6(%arg0: i32, %arg1: memref<4xf32, #tpu.memory_space<smem>>) -> (i32, i32) {
    %c0_i32 = arith.constant 0 : i32
    %c0_i32_0 = arith.constant 0 : i32
    %c0_i32_1 = arith.constant 0 : i32
    return %c0_i32, %c0_i32_0 : i32, i32
  }
  func.func @transform_7(%arg0: i32, %arg1: memref<4xf32, #tpu.memory_space<smem>>) -> (i32, i32) {
    %c0_i32 = arith.constant 0 : i32
    %c0_i32_0 = arith.constant 0 : i32
    %c0_i32_1 = arith.constant 0 : i32
    return %c0_i32, %c0_i32_0 : i32, i32
  }
  func.func @transform_8(%arg0: i32, %arg1: memref<4xf32, #tpu.memory_space<smem>>) -> (i32, i32) {
    %c0_i32 = arith.constant 0 : i32
    %c0_i32_0 = arith.constant 0 : i32
    %c0_i32_1 = arith.constant 0 : i32
    return %c0_i32, %c0_i32_0 : i32, i32
  }
  func.func @transform_9(%arg0: i32, %arg1: memref<4xf32, #tpu.memory_space<smem>>) -> (i32, i32) {
    %c0_i32 = arith.constant 0 : i32
    %c0_i32_0 = arith.constant 0 : i32
    return %c0_i32, %arg0 : i32, i32
  }
}

</mosaic_0001>

<llo_original>
// kernel: qthreelayer_bnfold_forward.1
$region0: #{qthreelayer_bnfold_forward.1}
  #allocation0 [shape = 'u32[]', space=smem, size = 0x4, offset = 0x4, fixed_abs, tag = 'smem constant byte address 0x4 - core index']
  #allocation1 [shape = 'u32[144,128]{1,0:T(1,128)}', space=vmem, size = 0x12000, scoped, tag = 'internal scratch']
  #allocation2 [shape = 's32[1]{0}', space=sflag, size = 0x4, scoped, tag = 'scoped memory for qthreelayer_bnfold_forward.1']
  #allocation3 [shape = 'u8[512]{0}', space=smem, size = 0x200, scoped, tag = 'prefetched SMEM operand 0']
  %s0 = inlined_call_operand.vmem [shape: f32[4], index: 0, kind: input, shape index: {}]
  %s1 = inlined_call_operand.vmem [shape: f32[16,128], index: 1, kind: input, shape index: {}]
  %s2 = inlined_call_operand.vmem [shape: bf16[64,16], index: 2, kind: input, shape index: {}]
  %s3 = inlined_call_operand.vmem [shape: f32[64,1], index: 3, kind: input, shape index: {}]
  %s4 = inlined_call_operand.vmem [shape: bf16[32,64], index: 4, kind: input, shape index: {}]
  %s5 = inlined_call_operand.vmem [shape: f32[32,1], index: 5, kind: input, shape index: {}]
  %s6 = inlined_call_operand.vmem [shape: bf16[32,32], index: 6, kind: input, shape index: {}]
  %s7 = inlined_call_operand.vmem [shape: f32[32,1], index: 7, kind: input, shape index: {}]
  %s8 = inlined_call_operand.vmem [shape: bf16[5,32], index: 8, kind: input, shape index: {}]
  %s9 = inlined_call_operand.vmem [shape: f32[5,1], index: 9, kind: input, shape index: {}]
  %s10 = inlined_call_operand.vmem [shape: f32[5,128], index: 10, kind: output, shape index: {}]
  %s11 = sld [smem:[#allocation0]]
  $region46: #{qthreelayer_bnfold_forward.1} parent=0
    _
  %s13 = ssub.s32 1, %s11
  %s14 = scalar_select 0, %s13, %s11
  %s15 = sshll.u32 %s0, 4
  %s16 = int_to_ptr.vmem [resolvable:$true] %s15
  %18 = dma.vmem_to_smem %s16, 16, [#allocation3], [#allocation2]
  %19 = dma.done [#allocation2], 16
  %20 = sfence
  // Predicated region
  $region2: #{qthreelayer_bnfold_forward.1} parent=0 // pred_check
    _
  $region3: #{qthreelayer_bnfold_forward.1} parent=0 // pred_check_branch
    %22 = sbr.rel (0) target = $region5
  $region4: #{qthreelayer_bnfold_forward.1} parent=0 // pred_region
    _
  $region5: #{qthreelayer_bnfold_forward.1} parent=0 // pred_fallthru
    _
  // Predicated region
  $region6: #{qthreelayer_bnfold_forward.1} parent=0 // pred_check
    _
  $region7: #{qthreelayer_bnfold_forward.1} parent=0 // pred_check_branch
    %24 = sbr.rel (0) target = $region9
  $region8: #{qthreelayer_bnfold_forward.1} parent=0 // pred_region
    _
  $region9: #{qthreelayer_bnfold_forward.1} parent=0 // pred_fallthru
    _
  // Predicated region
  $region10: #{qthreelayer_bnfold_forward.1} parent=0 // pred_check
    _
  $region11: #{qthreelayer_bnfold_forward.1} parent=0 // pred_check_branch
    %26 = sbr.rel (0) target = $region13
  $region12: #{qthreelayer_bnfold_forward.1} parent=0 // pred_region
    _
  $region13: #{qthreelayer_bnfold_forward.1} parent=0 // pred_fallthru
    _
  // Predicated region
  $region14: #{qthreelayer_bnfold_forward.1} parent=0 // pred_check
    _
  $region15: #{qthreelayer_bnfold_forward.1} parent=0 // pred_check_branch
    %28 = sbr.rel (0) target = $region17
  $region16: #{qthreelayer_bnfold_forward.1} parent=0 // pred_region
    _
  $region17: #{qthreelayer_bnfold_forward.1} parent=0 // pred_fallthru
    _
  // Predicated region
  $region18: #{qthreelayer_bnfold_forward.1} parent=0 // pred_check
    _
  $region19: #{qthreelayer_bnfold_forward.1} parent=0 // pred_check_branch
    %30 = sbr.rel (0) target = $region21
  $region20: #{qthreelayer_bnfold_forward.1} parent=0 // pred_region
    _
  $region21: #{qthreelayer_bnfold_forward.1} parent=0 // pred_fallthru
    _
  // Predicated region
  $region22: #{qthreelayer_bnfold_forward.1} parent=0 // pred_check
    _
  $region23: #{qthreelayer_bnfold_forward.1} parent=0 // pred_check_branch
    %32 = sbr.rel (0) target = $region25
  $region24: #{qthreelayer_bnfold_forward.1} parent=0 // pred_region
    _
  $region25: #{qthreelayer_bnfold_forward.1} parent=0 // pred_fallthru
    _
  // Predicated region
  $region26: #{qthreelayer_bnfold_forward.1} parent=0 // pred_check
    _
  $region27: #{qthreelayer_bnfold_forward.1} parent=0 // pred_check_branch
    %34 = sbr.rel (0) target = $region29
  $region28: #{qthreelayer_bnfold_forward.1} parent=0 // pred_region
    _
  $region29: #{qthreelayer_bnfold_forward.1} parent=0 // pred_fallthru
    _
  // Predicated region
  $region30: #{qthreelayer_bnfold_forward.1} parent=0 // pred_check
    _
  $region31: #{qthreelayer_bnfold_forward.1} parent=0 // pred_check_branch
    %36 = sbr.rel (0) target = $region33
  $region32: #{qthreelayer_bnfold_forward.1} parent=0 // pred_region
    _
  $region33: #{qthreelayer_bnfold_forward.1} parent=0 // pred_fallthru
    _
  // Predicated region
  $region34: #{qthreelayer_bnfold_forward.1} parent=0 // pred_check
    _
  $region35: #{qthreelayer_bnfold_forward.1} parent=0 // pred_check_branch
    %38 = sbr.rel (0) target = $region37
  $region36: #{qthreelayer_bnfold_forward.1} parent=0 // pred_region
    _
  $region37: #{qthreelayer_bnfold_forward.1} parent=0 // pred_fallthru
    _
  %v40 = vld [vmem:[%s1] sm:$0xff]
  %v41 = vld [vmem:[%s1 + $0x8] sm:$0xff]
  %v42 = vand.u32 2147483647, %v40
  %v43 = vand.u32 2147483647, %v41
  %44 = vmax.xlane.f32.xlu0 %v42
  %v45 = vpop.xlane.xlu0 %44
  %46 = vmax.xlane.f32.xlu0 %v43
  %v47 = vpop.xlane.xlu0 %46
  %v48 = vmax.f32 %v45, %v47
  %v49 = vrot.slane %v48, 4
  %v50 = vmax.f32 %v48, %v49
  %v51 = vrot.slane %v50, 2
  %v52 = vmax.f32 %v50, %v51
  %v53 = vrot.slane %v52, 1
  %v54 = vmax.f32 %v52, %v53
  %v55 = vmax.f32 %v54, 1e-08
  %v56 = vrcp.pop %v55
  %v57 = vmul.f32 %v55, %v56
  %v58 = vsub.f32 2.0, %v57
  %v59 = vmul.f32 %v56, %v58
  %v60 = vmul.f32 %v59, 31.0
  %v61 = vmul.f32 %v40, %v60
  %v62 = vmul.f32 %v41, %v60
  %v63 = vround.ne.pseudo %v61
  %v64 = vround.ne.pseudo %v62
  %v65 = vmax.f32 %v63, -31.0
  %v66 = vmax.f32 %v64, -31.0
  %v67 = vmin.f32 %v65, 31.0
  %v68 = vmin.f32 %v66, 31.0
  %v69 = vmul.f32 %v55, 0.032258064
  %s70 = sld [smem:[#allocation3]]
  %v71 = vstv %s70
  %v72 = vmul.f32 %v71, %v69
  %v73 = vld [vmem:[%s3] sm:$0xff]
  %v74 = vld [vmem:[%s3 + $0x8] sm:$0xff]
  %v75 = vld [vmem:[%s3 + $0x10] sm:$0xff]
  %v76 = vld [vmem:[%s3 + $0x18] sm:$0xff]
  %v77 = vld [vmem:[%s3 + $0x20] sm:$0xff]
  %v78 = vld [vmem:[%s3 + $0x28] sm:$0xff]
  %v79 = vld [vmem:[%s3 + $0x30] sm:$0xff]
  %v80 = vld [vmem:[%s3 + $0x38] sm:$0xff]
  %v81 = vrcp.pop %v72
  %v82 = vmul.f32 %v72, %v81
  %v83 = vsub.f32 2.0, %v82
  %v84 = vmul.f32 %v81, %v83
  %v85 = vmul.f32 %v73, %v84
  %v86 = vmul.f32 %v74, %v84
  %v87 = vmul.f32 %v75, %v84
  %v88 = vmul.f32 %v76, %v84
  %v89 = vmul.f32 %v77, %v84
  %v90 = vmul.f32 %v78, %v84
  %v91 = vmul.f32 %v79, %v84
  %v92 = vmul.f32 %v80, %v84
  %v93 = vround.ne.pseudo %v85
  %v94 = vround.ne.pseudo %v86
  %v95 = vround.ne.pseudo %v87
  %v96 = vround.ne.pseudo %v88
  %v97 = vround.ne.pseudo %v89
  %v98 = vround.ne.pseudo %v90
  %v99 = vround.ne.pseudo %v91
  %v100 = vround.ne.pseudo %v92
  %v101 = vld [vmem:[%s2] sm:$0xf]
  %v102 = vld [vmem:[%s2 + $0x4] sm:$0xf]
  %v103 = vld [vmem:[%s2 + $0x8] sm:$0xf]
  %v104 = vld [vmem:[%s2 + $0xc] sm:$0xf]
  %v105 = vld [vmem:[%s2 + $0x10] sm:$0xf]
  %v106 = vld [vmem:[%s2 + $0x14] sm:$0xf]
  %v107 = vld [vmem:[%s2 + $0x18] sm:$0xf]
  %v108 = vld [vmem:[%s2 + $0x1c] sm:$0xf]
  %v109 = vpack.c.bf16 %v68, %v67
  %111 = vset.pattern.permute.xlu0 0
  %112 = vperm.xlu0 %111, %v93
  %v113 = vpop.permute.xlu0 %112
  %116 = vset.pattern.permute.xlu0 0
  %117 = vperm.xlu0 %116, %v94
  %v118 = vpop.permute.xlu0 %117
  %121 = vset.pattern.permute.xlu0 0
  %122 = vperm.xlu0 %121, %v95
  %v123 = vpop.permute.xlu0 %122
  %126 = vset.pattern.permute.xlu0 0
  %127 = vperm.xlu0 %126, %v96
  %v128 = vpop.permute.xlu0 %127
  %131 = vset.pattern.permute.xlu0 0
  %132 = vperm.xlu0 %131, %v97
  %v133 = vpop.permute.xlu0 %132
  %136 = vset.pattern.permute.xlu0 0
  %137 = vperm.xlu0 %136, %v98
  %v138 = vpop.permute.xlu0 %137
  %141 = vset.pattern.permute.xlu0 0
  %142 = vperm.xlu0 %141, %v99
  %v143 = vpop.permute.xlu0 %142
  %146 = vset.pattern.permute.xlu0 0
  %147 = vperm.xlu0 %146, %v100
  %v148 = vpop.permute.xlu0 %147
  %v158 = vunpack.c.l.b16 %v101
  %v159 = vunpack.c.l.b16 %v102
  %v160 = vunpack.c.l.b16 %v103
  %v161 = vunpack.c.l.b16 %v104
  %v162 = vunpack.c.l.b16 %v105
  %v163 = vunpack.c.l.b16 %v106
  %v164 = vunpack.c.l.b16 %v107
  %v165 = vunpack.c.l.b16 %v108
  %v166 = vpack.c.b16 %v159, %v158
  %v167 = vpack.c.b16 %v161, %v160
  %v168 = vpack.c.b16 %v163, %v162
  %v169 = vpack.c.b16 %v165, %v164
  %vm170 = vcmask 130048
  %v172 = vsel %vm170, %v166, 0
  %v175 = vsel %vm170, %v167, 0
  %v178 = vsel %vm170, %v168, 0
  %v181 = vsel %vm170, %v169, 0
  %183 = vmatprep.subr.bf16.mxu0 0
  %184 = vmatpush1.bf16.msra.mxu0 %v109
  %185 = vmatprep.subr.bf16.mxu0 0
  %186 = vmatpush1.bf16.msra.mxu0 0
  %187 = vmatprep.subr.bf16.mxu0 0
  %188 = vmatpush1.bf16.msra.mxu0 0
  %189 = vmatprep.subr.bf16.mxu0 0
  %190 = vmatpush1.bf16.msra.mxu0 0
  %191 = vmatprep.subr.bf16.mxu0 0
  %192 = vmatpush1.bf16.msra.mxu0 0
  %193 = vmatprep.subr.bf16.mxu0 0
  %194 = vmatpush1.bf16.msra.mxu0 0
  %195 = vmatprep.subr.bf16.mxu0 0
  %196 = vmatpush1.bf16.msra.mxu0 0
  %197 = vmatprep.subr.bf16.mxu0 0
  %198 = vmatpush1.bf16.msra.mxu0 0
  %199 = vmatprep.subr.bf16.mxu0 0
  %200 = vmatpush1.bf16.msra.mxu0 0
  %201 = vmatprep.subr.bf16.mxu0 0
  %202 = vmatpush1.bf16.msra.mxu0 0
  %203 = vmatprep.subr.bf16.mxu0 0
  %204 = vmatpush1.bf16.msra.mxu0 0
  %205 = vmatprep.subr.bf16.mxu0 0
  %206 = vmatpush1.bf16.msra.mxu0 0
  %207 = vmatprep.subr.bf16.mxu0 0
  %208 = vmatpush1.bf16.msra.mxu0 0
  %209 = vmatprep.subr.bf16.mxu0 0
  %210 = vmatpush1.bf16.msra.mxu0 0
  %211 = vmatprep.subr.bf16.mxu0 0
  %212 = vmatpush1.bf16.msra.mxu0 0
  %213 = vmatprep.subr.bf16.mxu0 0
  %214 = vmatpush1.bf16.msra.mxu0 0
  %215 = vmatprep.mubr.bf16.mxu0 0
  %216 = vmatmul.mubr.bf16.gmra.mrb[0].mxu0 %v172
  %v217 = vpop.f32.mrb[0].mxu0
  %v218 = vadd.f32 %v113, %v217
  %v219 = vpop.f32.mrb[0].mxu0
  %v220 = vpop.f32.mrb[0].mxu0
  %v221 = vadd.f32 %v118, %v220
  %v222 = vpop.f32.mrb[0].mxu0
  %223 = vmatprep.mubr.bf16.mxu0 0
  %224 = vmatmul.mubr.bf16.gmra.mrb[0].mxu0 %v175
  %v225 = vpop.f32.mrb[0].mxu0
  %v226 = vadd.f32 %v123, %v225
  %v227 = vpop.f32.mrb[0].mxu0
  %v228 = vpop.f32.mrb[0].mxu0
  %v229 = vadd.f32 %v128, %v228
  %v230 = vpop.f32.mrb[0].mxu0
  %231 = vmatprep.mubr.bf16.mxu0 0
  %232 = vmatmul.mubr.bf16.gmra.mrb[0].mxu0 %v178
  %v233 = vpop.f32.mrb[0].mxu0
  %v234 = vadd.f32 %v133, %v233
  %v235 = vpop.f32.mrb[0].mxu0
  %v236 = vpop.f32.mrb[0].mxu0
  %v237 = vadd.f32 %v138, %v236
  %v238 = vpop.f32.mrb[0].mxu0
  %239 = vmatprep.mubr.bf16.mxu0 0
  %240 = vmatmul.mubr.bf16.gmra.mrb[0].mxu0 %v181
  %v241 = vpop.f32.mrb[0].mxu0
  %v242 = vadd.f32 %v143, %v241
  %v243 = vpop.f32.mrb[0].mxu0
  %v244 = vpop.f32.mrb[0].mxu0
  %v245 = vadd.f32 %v148, %v244
  %v246 = vpop.f32.mrb[0].mxu0
  %247 = vdwg.mxu0
  %v248 = vmul.f32 %v218, %v72
  %v249 = vmul.f32 %v221, %v72
  %v250 = vmul.f32 %v226, %v72
  %v251 = vmul.f32 %v229, %v72
  %v252 = vmul.f32 %v234, %v72
  %v253 = vmul.f32 %v237, %v72
  %v254 = vmul.f32 %v242, %v72
  %v255 = vmul.f32 %v245, %v72
  %v256 = vand.u32 2147483647, %v248
  %v257 = vand.u32 2147483647, %v249
  %v258 = vand.u32 2147483647, %v250
  %v259 = vand.u32 2147483647, %v251
  %v260 = vand.u32 2147483647, %v252
  %v261 = vand.u32 2147483647, %v253
  %v262 = vand.u32 2147483647, %v254
  %v263 = vand.u32 2147483647, %v255
  %264 = vmax.xlane.f32.xlu0 %v256
  %v265 = vpop.xlane.xlu0 %264
  %266 = vmax.xlane.f32.xlu0 %v257
  %v267 = vpop.xlane.xlu0 %266
  %268 = vmax.xlane.f32.xlu0 %v258
  %v269 = vpop.xlane.xlu0 %268
  %270 = vmax.xlane.f32.xlu0 %v259
  %v271 = vpop.xlane.xlu0 %270
  %272 = vmax.xlane.f32.xlu0 %v260
  %v273 = vpop.xlane.xlu0 %272
  %274 = vmax.xlane.f32.xlu0 %v261
  %v275 = vpop.xlane.xlu0 %274
  %276 = vmax.xlane.f32.xlu0 %v262
  %v277 = vpop.xlane.xlu0 %276
  %278 = vmax.xlane.f32.xlu0 %v263
  %v279 = vpop.xlane.xlu0 %278
  %v280 = vmax.f32 %v265, %v273
  %v281 = vmax.f32 %v267, %v275
  %v282 = vmax.f32 %v269, %v277
  %v283 = vmax.f32 %v271, %v279
  %v284 = vmax.f32 %v280, %v281
  %v285 = vmax.f32 %v282, %v283
  %v286 = vmax.f32 %v284, %v285
  %v287 = vrot.slane %v286, 4
  %v288 = vmax.f32 %v286, %v287
  %v289 = vrot.slane %v288, 2
  %v290 = vmax.f32 %v288, %v289
  %v291 = vrot.slane %v290, 1
  %v292 = vmax.f32 %v290, %v291
  %v293 = vmax.f32 %v292, 1e-08
  %v294 = vrcp.pop %v293
  %v295 = vmul.f32 %v293, %v294
  %v296 = vsub.f32 2.0, %v295
  %v297 = vmul.f32 %v294, %v296
  %v298 = vmul.f32 %v297, 31.0
  %v299 = vmul.f32 %v248, %v298
  %v300 = vmul.f32 %v249, %v298
  %v301 = vmul.f32 %v250, %v298
  %v302 = vmul.f32 %v251, %v298
  %v303 = vmul.f32 %v252, %v298
  %v304 = vmul.f32 %v253, %v298
  %v305 = vmul.f32 %v254, %v298
  %v306 = vmul.f32 %v255, %v298
  %v307 = vround.ne.pseudo %v299
  %v308 = vround.ne.pseudo %v300
  %v309 = vround.ne.pseudo %v301
  %v310 = vround.ne.pseudo %v302
  %v311 = vround.ne.pseudo %v303
  %v312 = vround.ne.pseudo %v304
  %v313 = vround.ne.pseudo %v305
  %v314 = vround.ne.pseudo %v306
  %v315 = vmax.f32 %v307, 0.0
  %v316 = vmax.f32 %v308, 0.0
  %v317 = vmax.f32 %v309, 0.0
  %v318 = vmax.f32 %v310, 0.0
  %v319 = vmax.f32 %v311, 0.0
  %v320 = vmax.f32 %v312, 0.0
  %v321 = vmax.f32 %v313, 0.0
  %v322 = vmax.f32 %v314, 0.0
  %v323 = vmin.f32 %v315, 31.0
  %v324 = vmin.f32 %v316, 31.0
  %v325 = vmin.f32 %v317, 31.0
  %v326 = vmin.f32 %v318, 31.0
  %v327 = vmin.f32 %v319, 31.0
  %v328 = vmin.f32 %v320, 31.0
  %v329 = vmin.f32 %v321, 31.0
  %v330 = vmin.f32 %v322, 31.0
  %v331 = vmul.f32 %v293, 0.032258064
  %s332 = sld [smem:[#allocation3 + $0x1]]
  %v333 = vstv %s332
  %v334 = vmul.f32 %v333, %v331
  %v335 = vld [vmem:[%s5] sm:$0xff]
  %v336 = vld [vmem:[%s5 + $0x8] sm:$0xff]
  %v337 = vld [vmem:[%s5 + $0x10] sm:$0xff]
  %v338 = vld [vmem:[%s5 + $0x18] sm:$0xff]
  %v339 = vrcp.pop %v334
  %v340 = vmul.f32 %v334, %v339
  %v341 = vsub.f32 2.0, %v340
  %v342 = vmul.f32 %v339, %v341
  %v343 = vmul.f32 %v335, %v342
  %v344 = vmul.f32 %v336, %v342
  %v345 = vmul.f32 %v337, %v342
  %v346 = vmul.f32 %v338, %v342
  %v347 = vround.ne.pseudo %v343
  %v348 = vround.ne.pseudo %v344
  %v349 = vround.ne.pseudo %v345
  %v350 = vround.ne.pseudo %v346
  %v351 = vld [vmem:[%s4] sm:$0xf]
  %v352 = vld [vmem:[%s4 + $0x4] sm:$0xf]
  %v353 = vld [vmem:[%s4 + $0x8] sm:$0xf]
  %v354 = vld [vmem:[%s4 + $0xc] sm:$0xf]
  %v355 = vpack.c.bf16 %v324, %v323
  %v356 = vpack.c.bf16 %v326, %v325
  %v357 = vpack.c.bf16 %v328, %v327
  %v358 = vpack.c.bf16 %v330, %v329
  %360 = vset.pattern.permute.xlu0 0
  %361 = vperm.xlu0 %360, %v347
  %v362 = vpop.permute.xlu0 %361
  %365 = vset.pattern.permute.xlu0 0
  %366 = vperm.xlu0 %365, %v348
  %v367 = vpop.permute.xlu0 %366
  %370 = vset.pattern.permute.xlu0 0
  %371 = vperm.xlu0 %370, %v349
  %v372 = vpop.permute.xlu0 %371
  %375 = vset.pattern.permute.xlu0 0
  %376 = vperm.xlu0 %375, %v350
  %v377 = vpop.permute.xlu0 %376
  %v383 = vunpack.c.l.b16 %v351
  %v384 = vunpack.c.l.b16 %v352
  %v385 = vunpack.c.l.b16 %v353
  %v386 = vunpack.c.l.b16 %v354
  %v387 = vpack.c.b16 %v384, %v383
  %v388 = vpack.c.b16 %v386, %v385
  %vm389 = vcmask 523264
  %v391 = vsel %vm389, %v387, 0
  %v394 = vsel %vm389, %v388, 0
  %396 = vmatprep.subr.bf16.mxu0 0
  %397 = vmatpush1.bf16.msra.mxu0 %v355
  %398 = vmatprep.subr.bf16.mxu0 0
  %399 = vmatpush1.bf16.msra.mxu0 %v356
  %400 = vmatprep.subr.bf16.mxu0 0
  %401 = vmatpush1.bf16.msra.mxu0 %v357
  %402 = vmatprep.subr.bf16.mxu0 0
  %403 = vmatpush1.bf16.msra.mxu0 %v358
  %404 = vmatprep.subr.bf16.mxu0 0
  %405 = vmatpush1.bf16.msra.mxu0 0
  %406 = vmatprep.subr.bf16.mxu0 0
  %407 = vmatpush1.bf16.msra.mxu0 0
  %408 = vmatprep.subr.bf16.mxu0 0
  %409 = vmatpush1.bf16.msra.mxu0 0
  %410 = vmatprep.subr.bf16.mxu0 0
  %411 = vmatpush1.bf16.msra.mxu0 0
  %412 = vmatprep.subr.bf16.mxu0 0
  %413 = vmatpush1.bf16.msra.mxu0 0
  %414 = vmatprep.subr.bf16.mxu0 0
  %415 = vmatpush1.bf16.msra.mxu0 0
  %416 = vmatprep.subr.bf16.mxu0 0
  %417 = vmatpush1.bf16.msra.mxu0 0
  %418 = vmatprep.subr.bf16.mxu0 0
  %419 = vmatpush1.bf16.msra.mxu0 0
  %420 = vmatprep.subr.bf16.mxu0 0
  %421 = vmatpush1.bf16.msra.mxu0 0
  %422 = vmatprep.subr.bf16.mxu0 0
  %423 = vmatpush1.bf16.msra.mxu0 0
  %424 = vmatprep.subr.bf16.mxu0 0
  %425 = vmatpush1.bf16.msra.mxu0 0
  %426 = vmatprep.subr.bf16.mxu0 0
  %427 = vmatpush1.bf16.msra.mxu0 0
  %428 = vmatprep.mubr.bf16.mxu0 0
  %429 = vmatmul.mubr.bf16.gmra.mrb[0].mxu0 %v391
  %v430 = vpop.f32.mrb[0].mxu0
  %v431 = vadd.f32 %v362, %v430
  %v432 = vpop.f32.mrb[0].mxu0
  %v433 = vpop.f32.mrb[0].mxu0
  %v434 = vadd.f32 %v367, %v433
  %v435 = vpop.f32.mrb[0].mxu0
  %436 = vmatprep.mubr.bf16.mxu0 0
  %437 = vmatmul.mubr.bf16.gmra.mrb[0].mxu0 %v394
  %v438 = vpop.f32.mrb[0].mxu0
  %v439 = vadd.f32 %v372, %v438
  %v440 = vpop.f32.mrb[0].mxu0
  %v441 = vpop.f32.mrb[0].mxu0
  %v442 = vadd.f32 %v377, %v441
  %v443 = vpop.f32.mrb[0].mxu0
  %444 = vdwg.mxu0
  %v445 = vmul.f32 %v431, %v334
  %v446 = vmul.f32 %v434, %v334
  %v447 = vmul.f32 %v439, %v334
  %v448 = vmul.f32 %v442, %v334
  %v449 = vand.u32 2147483647, %v445
  %v450 = vand.u32 2147483647, %v446
  %v451 = vand.u32 2147483647, %v447
  %v452 = vand.u32 2147483647, %v448
  %453 = vmax.xlane.f32.xlu0 %v449
  %v454 = vpop.xlane.xlu0 %453
  %455 = vmax.xlane.f32.xlu0 %v450
  %v456 = vpop.xlane.xlu0 %455
  %457 = vmax.xlane.f32.xlu0 %v451
  %v458 = vpop.xlane.xlu0 %457
  %459 = vmax.xlane.f32.xlu0 %v452
  %v460 = vpop.xlane.xlu0 %459
  %v461 = vmax.f32 %v454, %v456
  %v462 = vmax.f32 %v458, %v460
  %v463 = vmax.f32 %v461, %v462
  %v464 = vrot.slane %v463, 4
  %v465 = vmax.f32 %v463, %v464
  %v466 = vrot.slane %v465, 2
  %v467 = vmax.f32 %v465, %v466
  %v468 = vrot.slane %v467, 1
  %v469 = vmax.f32 %v467, %v468
  %v470 = vmax.f32 %v469, 1e-08
  %v471 = vrcp.pop %v470
  %v472 = vmul.f32 %v470, %v471
  %v473 = vsub.f32 2.0, %v472
  %v474 = vmul.f32 %v471, %v473
  %v475 = vmul.f32 %v474, 31.0
  %v476 = vmul.f32 %v445, %v475
  %v477 = vmul.f32 %v446, %v475
  %v478 = vmul.f32 %v447, %v475
  %v479 = vmul.f32 %v448, %v475
  %v480 = vround.ne.pseudo %v476
  %v481 = vround.ne.pseudo %v477
  %v482 = vround.ne.pseudo %v478
  %v483 = vround.ne.pseudo %v479
  %v484 = vmax.f32 %v480, 0.0
  %v485 = vmax.f32 %v481, 0.0
  %v486 = vmax.f32 %v482, 0.0
  %v487 = vmax.f32 %v483, 0.0
  %v488 = vmin.f32 %v484, 31.0
  %v489 = vmin.f32 %v485, 31.0
  %v490 = vmin.f32 %v486, 31.0
  %v491 = vmin.f32 %v487, 31.0
  %v492 = vmul.f32 %v470, 0.032258064
  %s493 = sld [smem:[#allocation3 + $0x2]]
  %v494 = vstv %s493
  %v495 = vmul.f32 %v494, %v492
  %v496 = vld [vmem:[%s7] sm:$0xff]
  %v497 = vld [vmem:[%s7 + $0x8] sm:$0xff]
  %v498 = vld [vmem:[%s7 + $0x10] sm:$0xff]
  %v499 = vld [vmem:[%s7 + $0x18] sm:$0xff]
  %v500 = vrcp.pop %v495
  %v501 = vmul.f32 %v495, %v500
  %v502 = vsub.f32 2.0, %v501
  %v503 = vmul.f32 %v500, %v502
  %v504 = vmul.f32 %v496, %v503
  %v505 = vmul.f32 %v497, %v503
  %v506 = vmul.f32 %v498, %v503
  %v507 = vmul.f32 %v499, %v503
  %v508 = vround.ne.pseudo %v504
  %v509 = vround.ne.pseudo %v505
  %v510 = vround.ne.pseudo %v506
  %v511 = vround.ne.pseudo %v507
  %v512 = vld [vmem:[%s6] sm:$0xf]
  %v513 = vld [vmem:[%s6 + $0x4] sm:$0xf]
  %v514 = vld [vmem:[%s6 + $0x8] sm:$0xf]
  %v515 = vld [vmem:[%s6 + $0xc] sm:$0xf]
  %v516 = vpack.c.bf16 %v489, %v488
  %v517 = vpack.c.bf16 %v491, %v490
  %519 = vset.pattern.permute.xlu0 0
  %520 = vperm.xlu0 %519, %v508
  %v521 = vpop.permute.xlu0 %520
  %524 = vset.pattern.permute.xlu0 0
  %525 = vperm.xlu0 %524, %v509
  %v526 = vpop.permute.xlu0 %525
  %529 = vset.pattern.permute.xlu0 0
  %530 = vperm.xlu0 %529, %v510
  %v531 = vpop.permute.xlu0 %530
  %534 = vset.pattern.permute.xlu0 0
  %535 = vperm.xlu0 %534, %v511
  %v536 = vpop.permute.xlu0 %535
  %v542 = vunpack.c.l.b16 %v512
  %v543 = vunpack.c.l.b16 %v513
  %v544 = vunpack.c.l.b16 %v514
  %v545 = vunpack.c.l.b16 %v515
  %v546 = vpack.c.b16 %v543, %v542
  %v547 = vpack.c.b16 %v545, %v544
  %vm548 = vcmask 261120
  %v550 = vsel %vm548, %v546, 0
  %v553 = vsel %vm548, %v547, 0
  %555 = vmatprep.subr.bf16.mxu0 0
  %556 = vmatpush1.bf16.msra.mxu0 %v516
  %557 = vmatprep.subr.bf16.mxu0 0
  %558 = vmatpush1.bf16.msra.mxu0 %v517
  %559 = vmatprep.subr.bf16.mxu0 0
  %560 = vmatpush1.bf16.msra.mxu0 0
  %561 = vmatprep.subr.bf16.mxu0 0
  %562 = vmatpush1.bf16.msra.mxu0 0
  %563 = vmatprep.subr.bf16.mxu0 0
  %564 = vmatpush1.bf16.msra.mxu0 0
  %565 = vmatprep.subr.bf16.mxu0 0
  %566 = vmatpush1.bf16.msra.mxu0 0
  %567 = vmatprep.subr.bf16.mxu0 0
  %568 = vmatpush1.bf16.msra.mxu0 0
  %569 = vmatprep.subr.bf16.mxu0 0
  %570 = vmatpush1.bf16.msra.mxu0 0
  %571 = vmatprep.subr.bf16.mxu0 0
  %572 = vmatpush1.bf16.msra.mxu0 0
  %573 = vmatprep.subr.bf16.mxu0 0
  %574 = vmatpush1.bf16.msra.mxu0 0
  %575 = vmatprep.subr.bf16.mxu0 0
  %576 = vmatpush1.bf16.msra.mxu0 0
  %577 = vmatprep.subr.bf16.mxu0 0
  %578 = vmatpush1.bf16.msra.mxu0 0
  %579 = vmatprep.subr.bf16.mxu0 0
  %580 = vmatpush1.bf16.msra.mxu0 0
  %581 = vmatprep.subr.bf16.mxu0 0
  %582 = vmatpush1.bf16.msra.mxu0 0
  %583 = vmatprep.subr.bf16.mxu0 0
  %584 = vmatpush1.bf16.msra.mxu0 0
  %585 = vmatprep.subr.bf16.mxu0 0
  %586 = vmatpush1.bf16.msra.mxu0 0
  %587 = vmatprep.mubr.bf16.mxu0 0
  %588 = vmatmul.mubr.bf16.gmra.mrb[0].mxu0 %v550
  %v589 = vpop.f32.mrb[0].mxu0
  %v590 = vadd.f32 %v521, %v589
  %v591 = vpop.f32.mrb[0].mxu0
  %v592 = vpop.f32.mrb[0].mxu0
  %v593 = vadd.f32 %v526, %v592
  %v594 = vpop.f32.mrb[0].mxu0
  %595 = vmatprep.mubr.bf16.mxu0 0
  %596 = vmatmul.mubr.bf16.gmra.mrb[0].mxu0 %v553
  %v597 = vpop.f32.mrb[0].mxu0
  %v598 = vadd.f32 %v531, %v597
  %v599 = vpop.f32.mrb[0].mxu0
  %v600 = vpop.f32.mrb[0].mxu0
  %v601 = vadd.f32 %v536, %v600
  %v602 = vpop.f32.mrb[0].mxu0
  %603 = vdwg.mxu0
  %v604 = vmul.f32 %v590, %v495
  %v605 = vmul.f32 %v593, %v495
  %v606 = vmul.f32 %v598, %v495
  %v607 = vmul.f32 %v601, %v495
  %v608 = vand.u32 2147483647, %v604
  %v609 = vand.u32 2147483647, %v605
  %v610 = vand.u32 2147483647, %v606
  %v611 = vand.u32 2147483647, %v607
  %612 = vmax.xlane.f32.xlu0 %v608
  %v613 = vpop.xlane.xlu0 %612
  %614 = vmax.xlane.f32.xlu0 %v609
  %v615 = vpop.xlane.xlu0 %614
  %616 = vmax.xlane.f32.xlu0 %v610
  %v617 = vpop.xlane.xlu0 %616
  %618 = vmax.xlane.f32.xlu0 %v611
  %v619 = vpop.xlane.xlu0 %618
  %v620 = vmax.f32 %v613, %v615
  %v621 = vmax.f32 %v617, %v619
  %v622 = vmax.f32 %v620, %v621
  %v623 = vrot.slane %v622, 4
  %v624 = vmax.f32 %v622, %v623
  %v625 = vrot.slane %v624, 2
  %v626 = vmax.f32 %v624, %v625
  %v627 = vrot.slane %v626, 1
  %v628 = vmax.f32 %v626, %v627
  %v629 = vmax.f32 %v628, 1e-08
  %v630 = vrcp.pop %v629
  %v631 = vmul.f32 %v629, %v630
  %v632 = vsub.f32 2.0, %v631
  %v633 = vmul.f32 %v630, %v632
  %v634 = vmul.f32 %v633, 31.0
  %v635 = vmul.f32 %v604, %v634
  %v636 = vmul.f32 %v605, %v634
  %v637 = vmul.f32 %v606, %v634
  %v638 = vmul.f32 %v607, %v634
  %v639 = vround.ne.pseudo %v635
  %v640 = vround.ne.pseudo %v636
  %v641 = vround.ne.pseudo %v637
  %v642 = vround.ne.pseudo %v638
  %v643 = vmax.f32 %v639, 0.0
  %v644 = vmax.f32 %v640, 0.0
  %v645 = vmax.f32 %v641, 0.0
  %v646 = vmax.f32 %v642, 0.0
  %v647 = vmin.f32 %v643, 31.0
  %v648 = vmin.f32 %v644, 31.0
  %v649 = vmin.f32 %v645, 31.0
  %v650 = vmin.f32 %v646, 31.0
  %v651 = vmul.f32 %v629, 0.032258064
  %s652 = sld [smem:[#allocation3 + $0x3]]
  %v653 = vstv %s652
  %v654 = vmul.f32 %v653, %v651
  %v655 = vld [vmem:[%s9] sm:$0x1f]
  %v656 = vrcp.pop %v654
  %v657 = vmul.f32 %v654, %v656
  %v658 = vsub.f32 2.0, %v657
  %v659 = vmul.f32 %v656, %v658
  %v660 = vmul.f32 %v655, %v659
  %v661 = vround.ne.pseudo %v660
  %v662 = vld [vmem:[%s8] sm:$0x7]
  %v663 = vpack.c.bf16 %v648, %v647
  %v664 = vpack.c.bf16 %v650, %v649
  %666 = vset.pattern.permute.xlu0 0
  %667 = vperm.xlu0 %666, %v661
  %v668 = vpop.permute.xlu0 %667
  %v671 = vsel %vm548, %v662, 0
  %673 = vmatprep.subr.bf16.mxu0 0
  %674 = vmatpush1.bf16.msra.mxu0 %v663
  %675 = vmatprep.subr.bf16.mxu0 0
  %676 = vmatpush1.bf16.msra.mxu0 %v664
  %677 = vmatprep.subr.bf16.mxu0 0
  %678 = vmatpush1.bf16.msra.mxu0 0
  %679 = vmatprep.subr.bf16.mxu0 0
  %680 = vmatpush1.bf16.msra.mxu0 0
  %681 = vmatprep.subr.bf16.mxu0 0
  %682 = vmatpush1.bf16.msra.mxu0 0
  %683 = vmatprep.subr.bf16.mxu0 0
  %684 = vmatpush1.bf16.msra.mxu0 0
  %685 = vmatprep.subr.bf16.mxu0 0
  %686 = vmatpush1.bf16.msra.mxu0 0
  %687 = vmatprep.subr.bf16.mxu0 0
  %688 = vmatpush1.bf16.msra.mxu0 0
  %689 = vmatprep.subr.bf16.mxu0 0
  %690 = vmatpush1.bf16.msra.mxu0 0
  %691 = vmatprep.subr.bf16.mxu0 0
  %692 = vmatpush1.bf16.msra.mxu0 0
  %693 = vmatprep.subr.bf16.mxu0 0
  %694 = vmatpush1.bf16.msra.mxu0 0
  %695 = vmatprep.subr.bf16.mxu0 0
  %696 = vmatpush1.bf16.msra.mxu0 0
  %697 = vmatprep.subr.bf16.mxu0 0
  %698 = vmatpush1.bf16.msra.mxu0 0
  %699 = vmatprep.subr.bf16.mxu0 0
  %700 = vmatpush1.bf16.msra.mxu0 0
  %701 = vmatprep.subr.bf16.mxu0 0
  %702 = vmatpush1.bf16.msra.mxu0 0
  %703 = vmatprep.subr.bf16.mxu0 0
  %704 = vmatpush1.bf16.msra.mxu0 0
  %705 = vmatprep.mubr.bf16.mxu0 0
  %706 = vmatmul.mubr.bf16.gmra.mrb[0].mxu0 %v671
  %v707 = vpop.f32.mrb[0].mxu0
  %v708 = vadd.f32 %v668, %v707
  %v709 = vpop.f32.mrb[0].mxu0
  %v710 = vpop.f32.mrb[0].mxu0
  %v711 = vpop.f32.mrb[0].mxu0
  %712 = vdwg.mxu0
  %v713 = vmul.f32 %v708, %v654
  %v714 = vand.u32 2147483647, %v713
  %vm715 = vcmask 1044480
  %v716 = vsel %vm715, %v714, -inf
  %717 = vmax.xlane.f32.xlu0 %v716
  %v718 = vpop.xlane.xlu0 %717
  %v719 = vsel %vm715, %v718, -inf
  %v720 = vrot.slane %v719, 4
  %v721 = vmax.f32 %v719, %v720
  %v722 = vrot.slane %v721, 2
  %v723 = vmax.f32 %v721, %v722
  %v724 = vrot.slane %v723, 1
  %v725 = vmax.f32 %v723, %v724
  %v726 = vmax.f32 %v725, 1e-08
  %v727 = vrcp.pop %v726
  %v728 = vmul.f32 %v726, %v727
  %v729 = vsub.f32 2.0, %v728
  %v730 = vmul.f32 %v727, %v729
  %v731 = vmul.f32 %v730, 31.0
  %v732 = vmul.f32 %v713, %v731
  %v733 = vround.ne.pseudo %v732
  %v734 = vmax.f32 %v733, -31.0
  %v735 = vmin.f32 %v734, 31.0
  %v736 = vmul.f32 %v726, 0.032258064
  %v737 = vmul.f32 %v735, %v736
  %v738 = vsel %vm715, %v737, -inf
  %v739 = vrot.slane %v738, 4
  %v740 = vmax.f32 %v738, %v739
  %v741 = vrot.slane %v740, 2
  %v742 = vmax.f32 %v740, %v741
  %v743 = vrot.slane %v742, 1
  %v744 = vmax.f32 %v742, %v743
  %v745 = vsub.f32 %v737, %v744
  %v746 = vmul.f32 %v745, 1.442695
  %v747 = vpow.pop %v746
  %v748 = vsel %vm715, %v747, 0.0
  %v749 = vrot.slane %v748, 4
  %v750 = vadd.f32 %v748, %v749
  %v751 = vrot.slane %v750, 2
  %v752 = vadd.f32 %v750, %v751
  %v753 = vrot.slane %v752, 1
  %v754 = vadd.f32 %v752, %v753
  %v755 = vrcp.pop %v754
  %v756 = vmul.f32 %v754, %v755
  %v757 = vsub.f32 2.0, %v756
  %v758 = vmul.f32 %v755, %v757
  %v759 = vmul.f32 %v747, %v758
  %760 = vst [vmem:[%s10] sm:$0x1f] %v759
  // Predicated region
  $region38: #{qthreelayer_bnfold_forward.1} parent=0 // pred_check
    _
  $region39: #{qthreelayer_bnfold_forward.1} parent=0 // pred_check_branch
    %762 = sbr.rel (0) target = $region41
  $region40: #{qthreelayer_bnfold_forward.1} parent=0 // pred_region
    _
  $region41: #{qthreelayer_bnfold_forward.1} parent=0 // pred_fallthru
    _
  // Predicated region
  $region42: #{qthreelayer_bnfold_forward.1} parent=0 // pred_check
    _
  $region43: #{qthreelayer_bnfold_forward.1} parent=0 // pred_check_branch
    %764 = sbr.rel (0) target = $region45
  $region44: #{qthreelayer_bnfold_forward.1} parent=0 // pred_region
    _
  $region45: #{qthreelayer_bnfold_forward.1} parent=0 // pred_fallthru
    _

</llo_original>
